<compile_context>
chip_gen: v6e
topology: v6e:2x2x1
jax: 0.10.0
libtpu: 0.0.40
codegen_flags: <defaults>
</compile_context>

<pallas_src>
import math

import jax
import jax.numpy as jnp
from jax import lax
from jax.experimental import pallas as pl
from jax.experimental.pallas import tpu as pltpu


def _pick_tile(n, cap, mult=8):
    """Largest divisor of n that is <= cap and a multiple of `mult` (with an
    8-multiple fallback).  If n <= cap, the full dimension is used (full-extent
    blocks are always legal)."""
    if n <= cap:
        return n
    for m in (mult, 8):
        for t in range(cap - cap % m, 0, -m):
            if n % t == 0:
                return t
    raise ValueError(
        f"no tile <= {cap} divides {n} and is a multiple of 8; "
        f"pad the dimension to a multiple of 8")


# --------------------- Fused QKV projection: y = x @ W^T + b ---------------------
def _linear_bias_kernel(x_ref, w_ref, b_ref, o_ref):
    # x: (tm, K) bf16, w: (K, tn) bf16, b: (1, tn) f32 -> o: (tm, tn) bf16
    acc = jnp.dot(x_ref[...], w_ref[...], preferred_element_type=jnp.float32)
    o_ref[...] = (acc + b_ref[...]).astype(o_ref.dtype)


def fused_qkv_projection(x2d, w_t, bias, *, tm_cap=256, tn_cap=512):
    """x2d: (M, K) bf16; w_t: (K, C) bf16; bias: (C,) f32 -> (M, C) bf16."""
    M, K = x2d.shape
    _, C = w_t.shape
    tm = _pick_tile(M, tm_cap, 16)      # bf16 sublane packing
    tn = _pick_tile(C, tn_cap, 128)     # lane-dense output tiles (unmasked vst)
    gm, gn = M // tm, C // tn

    # Pick which operand is re-streamed from HBM: with the row axis innermost
    # the (K, tn) weight tile stays resident (x re-read gn times); with the
    # column axis innermost the (tm, K) x tile stays resident (weights re-read
    # gm times).  Choose whichever re-reads fewer bytes.
    if M * gn <= C * gm:
        grid = (gn, gm)                              # weights resident
        x_map = lambda j, i: (i, 0)
        w_map = lambda j, i: (0, j)
        b_map = lambda j, i: (0, j)
        o_map = lambda j, i: (i, j)
    else:
        grid = (gm, gn)                              # x resident
        x_map = lambda i, j: (i, 0)
        w_map = lambda i, j: (0, j)
        b_map = lambda i, j: (0, j)
        o_map = lambda i, j: (i, j)

    # TODO(synk): for very large d_model, tile K with an f32 VMEM accumulator
    # (P3 pattern) instead of keeping the full K extent resident in VMEM.
    return pl.pallas_call(
        _linear_bias_kernel,
        out_shape=jax.ShapeDtypeStruct((M, C), jnp.bfloat16),
        grid_spec=pltpu.PrefetchScalarGridSpec(
            num_scalar_prefetch=0,
            grid=grid,
            in_specs=[
                pl.BlockSpec((tm, K), x_map),
                pl.BlockSpec((K, tn), w_map),
                pl.BlockSpec((1, tn), b_map),
            ],
            out_specs=pl.BlockSpec((tm, tn), o_map),
        ),
        compiler_params=pltpu.CompilerParams(
            dimension_semantics=("parallel", "parallel")),
    )(x2d, w_t, bias.reshape(1, C))


# ------------------------ Flash-style GQA attention kernel ------------------------
def _make_gqa_flash_kernel(G, D):
    def kernel(q_ref, k_ref, v_ref, o_ref, m_sc, l_sc, acc_sc):
        kj = pl.program_id(3)

        @pl.when(kj == 0)
        def _init():
            m_sc[...] = jnp.full_like(m_sc, -jnp.inf)
            l_sc[...] = jnp.zeros_like(l_sc)
            acc_sc[...] = jnp.zeros_like(acc_sc)

        k = k_ref[...]                                         # (tk, D) bf16
        v = v_ref[...]                                         # (tk, D) bf16

        # G is small & static: unrolled loop.  Every group reuses the K/V tile
        # already resident in VMEM -> no per-group K/V HBM traffic.
        for g in range(G):
            q_g = q_ref[:, g * D:(g + 1) * D]                  # static lane slice
            # s = q_g @ k^T (q pre-scaled by 1/sqrt(D)); contract last dims so
            # K is consumed in its natural (lane = D) layout.
            s = lax.dot_general(
                q_g, k, dimension_numbers=(((1,), (1,)), ((), ())),
                preferred_element_type=jnp.float32)            # (tq, tk) f32

            m_prev = m_sc[g]
            m_new = jnp.maximum(m_prev, jnp.max(s, axis=-1, keepdims=True))
            alpha = jnp.exp(m_prev - m_new)
            p = jnp.exp(s - m_new)
            l_sc[g] = alpha * l_sc[g] + jnp.sum(p, axis=-1, keepdims=True)
            acc_sc[g] = alpha * acc_sc[g] + jnp.dot(
                p.astype(v.dtype), v, preferred_element_type=jnp.float32)
            m_sc[g] = m_new

        @pl.when(kj == pl.num_programs(3) - 1)
        def _finalize():
            for g in range(G):
                o_ref[:, g * D:(g + 1) * D] = (
                    acc_sc[g] * pl.reciprocal(l_sc[g], approx=True)
                ).astype(o_ref.dtype)

    return kernel


def gqa_attention(qkv, *, B, N, G, H, D, tq_cap=512, tk_cap=512,
                  out_dtype=jnp.bfloat16):
    """qkv: (B, N, (G*H + 2*H) * D) bf16 fused projection (q pre-scaled by 1/sqrt(D)).

    Fused channel layout: q channels first in (h, g, d) order (all G groups of
    one KV head contiguous), then k channels (h, d), then v channels (h, d).
    Output is (B, N, H*G*D) in the torch output channel order (h, g, d).
    """
    QH = G * H
    tq = _pick_tile(N, tq_cap, 16)
    tk = _pick_tile(N, tk_cap, 16)
    grid = (B, H, N // tq, N // tk)
    kernel = _make_gqa_flash_kernel(G, D)
    return pl.pallas_call(
        kernel,
        out_shape=jax.ShapeDtypeStruct((B, N, H * G * D), out_dtype),
        grid_spec=pltpu.PrefetchScalarGridSpec(
            num_scalar_prefetch=0,
            grid=grid,
            in_specs=[
                # q tile for (b, h, qi): all G groups of head h, resident across kj.
                pl.BlockSpec((None, tq, G * D),
                             lambda b, h, qi, kj: (b, qi, h)),
                # k tile for (b, h, kj): channel block QH + h (shared by all groups)
                pl.BlockSpec((None, tk, D),
                             lambda b, h, qi, kj: (b, kj, QH + h)),
                # v tile for (b, h, kj): channel block QH + H + h
                pl.BlockSpec((None, tk, D),
                             lambda b, h, qi, kj: (b, kj, QH + H + h)),
            ],
            # G*D-wide lane-dense store directly into the final (b, n, h*g*d) layout.
            out_specs=pl.BlockSpec((None, tq, G * D),
                                   lambda b, h, qi, kj: (b, qi, h)),
            scratch_shapes=[
                pltpu.VMEM((G, tq, 1), jnp.float32),   # running max (per group)
                pltpu.VMEM((G, tq, 1), jnp.float32),   # running denominator
                pltpu.VMEM((G, tq, D), jnp.float32),   # output accumulator
            ],
        ),
        compiler_params=pltpu.CompilerParams(
            dimension_semantics=("parallel", "parallel", "parallel",
                                 "arbitrary")),
    )(qkv, qkv, qkv)


# ---------------------------------- GQA module ----------------------------------
def init_gqa_params(key, d_model, head_dim, q_heads, kv_heads):
    ks = jax.random.split(key, 6)
    bound = 1.0 / math.sqrt(d_model)  # torch nn.Linear default init
    u = lambda k, shape: jax.random.uniform(k, shape, jnp.float32, -bound, bound)
    return {
        "wq": u(ks[0], (head_dim * q_heads, d_model)),
        "bq": u(ks[1], (head_dim * q_heads,)),
        "wk": u(ks[2], (head_dim * kv_heads, d_model)),
        "bk": u(ks[3], (head_dim * kv_heads,)),
        "wv": u(ks[4], (head_dim * kv_heads, d_model)),
        "bv": u(ks[5], (head_dim * kv_heads,)),
    }


def gqa_forward(params, x, *, d_model, head_dim, q_heads, kv_heads):
    b, n, _ = x.shape
    if q_heads % kv_heads != 0:
        raise ValueError(f"query_heads {q_heads} must be divisible by kv_heads {kv_heads}")
    g, h, d = q_heads // kv_heads, kv_heads, head_dim

    # Reorder Q projection rows from torch's (g, h, d) channel order to
    # (h, g, d) so all G groups of one KV head are contiguous in the fused
    # projection output, and fold 1/sqrt(head_dim) into the Q weights/bias.
    scale = 1.0 / math.sqrt(head_dim)
    wq = (params["wq"].reshape(g, h, d, d_model).transpose(1, 0, 2, 3)
          * scale).reshape(g * h * d, d_model)
    bq = (params["bq"].reshape(g, h, d).transpose(1, 0, 2) * scale).reshape(-1)

    w_fused = jnp.concatenate([wq, params["wk"], params["wv"]], axis=0)  # (C, d_model)
    b_fused = jnp.concatenate([bq, params["bk"], params["bv"]], axis=0)  # (C,)

    x2d = x.reshape(b * n, d_model).astype(jnp.bfloat16)
    qkv = fused_qkv_projection(
        x2d, w_fused.T.astype(jnp.bfloat16), b_fused.astype(jnp.float32))
    qkv = qkv.reshape(b, n, (q_heads + 2 * kv_heads) * head_dim)  # free view

    # Output already in torch's (b, n, h*g*d) channel order -> no transposes.
    return gqa_attention(qkv, B=b, N=n, G=g, H=kv_heads, D=head_dim,
                         out_dtype=jnp.bfloat16)


def gqa_reference(params, x, *, d_model, head_dim, q_heads, kv_heads):
    b, n, _ = x.shape
    g = q_heads // kv_heads
    xq = x @ params["wq"].T + params["bq"]
    xk = x @ params["wk"].T + params["bk"]
    xv = x @ params["wv"].T + params["bv"]
    q5 = xq.reshape(b, n, g, kv_heads, head_dim).transpose(0, 2, 3, 1, 4)
    k4 = xk.reshape(b, n, kv_heads, head_dim).transpose(0, 2, 1, 3)[:, None]
    v4 = xv.reshape(b, n, kv_heads, head_dim).transpose(0, 2, 1, 3)[:, None]
    s = jnp.einsum("bghnd,bzhmd->bghnm", q5, k4) / math.sqrt(head_dim)
    p = jax.nn.softmax(s, axis=-1)
    o = jnp.einsum("bghnm,bzhmd->bghnd", p, v4)
    return o.transpose(0, 3, 2, 1, 4).reshape(b, n, kv_heads * g * head_dim)


if __name__ == "__main__":
    d_model, head_dim, q_heads, kv_heads = 512, 128, 8, 4
    b, n = 2, 8

    key = jax.random.PRNGKey(0)
    kx, kp = jax.random.split(key)
    x = jax.random.normal(kx, (b, n, d_model), jnp.float32)
    params = init_gqa_params(kp, d_model, head_dim, q_heads, kv_heads)

    out = gqa_forward(params, x, d_model=d_model, head_dim=head_dim,
                      q_heads=q_heads, kv_heads=kv_heads)
    out = jax.block_until_ready(out)

    ref = gqa_reference(params, x, d_model=d_model, head_dim=head_dim,
                        q_heads=q_heads, kv_heads=kv_heads)
    assert out.shape == (b, n, q_heads * head_dim), out.shape
    # bf16 matmul operands / bf16 output + approx reciprocal -> looser tolerance.
    err = float(jnp.max(jnp.abs(out.astype(jnp.float32) - ref)))
    assert err < 5e-2, err

    print("KERNEL_OK")
</pallas_src>

<mosaic_0001>
module attributes {stable_mosaic.version = 11 : i64} {
  func.func @_linear_bias_kernel(%arg0: i32, %arg1: i32, %arg2: memref<16x512xbf16, #tpu.memory_space<vmem>>, %arg3: memref<512x512xbf16, #tpu.memory_space<vmem>>, %arg4: memref<1x512xf32, #tpu.memory_space<vmem>>, %arg5: memref<16x512xbf16, #tpu.memory_space<vmem>>) attributes {dimension_semantics = [#tpu.dimension_semantics<parallel>, #tpu.dimension_semantics<parallel>], iteration_bounds = array<i64: 4, 1>, scalar_prefetch = 0 : i64, scratch_operands = 0 : i64, tpu.core_type = #tpu.core_type<tc>, window_params = [{transform_indices = @transform_0, window_bounds = array<i64: 16, 512>}, {transform_indices = @transform_1, window_bounds = array<i64: 512, 512>}, {transform_indices = @transform_2, window_bounds = array<i64: 1, 512>}, {transform_indices = @transform_3, window_bounds = array<i64: 16, 512>}]} {
    %c0 = arith.constant 0 : index
    %c0_0 = arith.constant 0 : index
    %0 = vector.load %arg2[%c0, %c0_0] : memref<16x512xbf16, #tpu.memory_space<vmem>>, vector<16x512xbf16>
    %c0_1 = arith.constant 0 : index
    %c0_2 = arith.constant 0 : index
    %1 = vector.load %arg3[%c0_1, %c0_2] : memref<512x512xbf16, #tpu.memory_space<vmem>>, vector<512x512xbf16>
    %cst = arith.constant dense<0.000000e+00> : vector<16x512xf32>
    %2 = tpu.matmul %0, %1, %cst {dimension_numbers = #tpu.dot_dimension_numbers<[1], [0], [0], [1], [0, 0, 1, 1], [], []>} : vector<16x512xbf16>, vector<512x512xbf16>, vector<16x512xf32> -> vector<16x512xf32>
    %c0_3 = arith.constant 0 : index
    %c0_4 = arith.constant 0 : index
    %3 = vector.load %arg4[%c0_3, %c0_4] : memref<1x512xf32, #tpu.memory_space<vmem>>, vector<1x512xf32>
    %4 = vector.broadcast %3 : vector<1x512xf32> to vector<16x512xf32>
    %5 = arith.addf %2, %4 : vector<16x512xf32>
    %6 = arith.truncf %5 : vector<16x512xf32> to vector<16x512xbf16>
    %c0_5 = arith.constant 0 : index
    %c0_6 = arith.constant 0 : index
    %7 = vector.load %arg5[%c0_5, %c0_6] : memref<16x512xbf16, #tpu.memory_space<vmem>>, vector<16x512xbf16>
    tpu.vector_store %arg5[%c0_5, %c0_6], %6 {strides = array<i32>} : memref<16x512xbf16, #tpu.memory_space<vmem>>, vector<16x512xbf16>,
    return
  }
  func.func @transform_0(%arg0: i32, %arg1: i32) -> (i32, i32) {
    %c0_i32 = arith.constant 0 : i32
    %c0_i32_0 = arith.constant 0 : i32
    return %arg1, %c0_i32 : i32, i32
  }
  func.func @transform_1(%arg0: i32, %arg1: i32) -> (i32, i32) {
    %c0_i32 = arith.constant 0 : i32
    %c0_i32_0 = arith.constant 0 : i32
    return %c0_i32, %arg0 : i32, i32
  }
  func.func @transform_2(%arg0: i32, %arg1: i32) -> (i32, i32) {
    %c0_i32 = arith.constant 0 : i32
    %c0_i32_0 = arith.constant 0 : i32
    return %c0_i32, %arg0 : i32, i32
  }
  func.func @transform_3(%arg0: i32, %arg1: i32) -> (i32, i32) {
    %c0_i32 = arith.constant 0 : i32
    return %arg1, %arg0 : i32, i32
  }
}

</mosaic_0001>

<llo_original>
// kernel: tpu_custom_call.1
$region0: #{tpu_custom_call.1}
  #allocation0 [shape = 'u32[]', space=smem, size = 0x4, offset = 0x4, fixed_abs, tag = 'smem constant byte address 0x4 - core index']
  #allocation1 [shape = 'u32[144,128]{1,0:T(1,128)}', space=vmem, size = 0x12000, scoped, tag = 'internal scratch']
  %s0 = inlined_call_operand.hbm [shape: bf16[16,512], index: 0, kind: input, shape index: {}]
  %s1 = inlined_call_operand.hbm [shape: bf16[512,2048], index: 1, kind: input, shape index: {}]
  %s2 = inlined_call_operand.hbm [shape: f32[1,2048], index: 2, kind: input, shape index: {}]
  %s3 = inlined_call_operand.hbm [shape: bf16[16,2048], index: 3, kind: output, shape index: {}]
  %s4 = sld [smem:[#allocation0]]
  $region57: #{tpu_custom_call.1} parent=0
    _
  %s6 = ssub.s32 1, %s4
  %s7 = scalar_select 0, %s6, %s4
  $region1: #{tpu_custom_call.1} parent=0
    #allocation2 [shape = 'u8[16384]{0}', space=vmem, size = 0x4000, scoped, tag = 'input window, operand 0, single buffered']
    #allocation3 [shape = 's32[2]{0}', space=sflag, size = 0x8, scoped, tag = 'scoped memory for tpu_custom_call.1']
    #allocation4 [shape = 's32[2]{0}', space=sflag, size = 0x8, scoped, tag = 'scoped memory for tpu_custom_call.1']
    #allocation5 [shape = 'u8[1048576]{0}', space=vmem, size = 0x100000, scoped, tag = 'input window, operand 1']
    #allocation6 [shape = 's32[2]{0}', space=sflag, size = 0x8, scoped, tag = 'scoped memory for tpu_custom_call.1']
    #allocation7 [shape = 'u8[4096]{0}', space=vmem, size = 0x1000, scoped, tag = 'input window, operand 2']
    #allocation8 [shape = 'u8[32768]{0}', space=vmem, size = 0x8000, scoped, tag = 'output window, operand 0']
    %8 = vsyncpa [#allocation3], 0
    %9 = vsyncpa [#allocation6], 0
    %s10 = scalar_lea.sflag [#allocation6], 1
    %11 = vsyncpa %s10, 0
    %12 = vsyncpa [#allocation4], 0
    %s13 = scalar_lea.sflag [#allocation4], 1
    %14 = vsyncpa %s13, 0
    loop: start=0, step=1, limit=6
    $region2: #{tpu_custom_call.1} parent=1 // loop_pre_header
      _
    $region3: #{tpu_custom_call.1} parent=1 // loop_header
      %s16 = sphi 0, %s20
      %p17 = scmp.ge.s32.totalorder %s16, 6
      %s23 = sphi 0, %s35
      %s24 = sphi 0, %s31
      %s25 = sphi 0, %s23
      %s26 = sphi 0, %s24
      %s27 = sphi 0, %s25
      %s28 = sphi 0, %s26
      %s38 = sphi 0, %s40
      %s41 = sphi 0, %s38
      %s42 = sphi 0, %s41
      %s58 = sphi 0, %s42
      %s64 = sphi 0, %s66
      %s67 = sphi 0, %s64
      %s68 = sphi 0, %s67
      %s84 = sphi 0, %s68
      %s90 = sphi 0, %s92
      %s93 = sphi 0, %s90
      %s94 = sphi 0, %s93
      %s110 = sphi 0, %s94
      %s118 = sphi 0, %s120
      %s121 = sphi 0, %s118
      %s122 = sphi 0, %s121
      %s138 = sphi 0, %s122
    $region4: #{tpu_custom_call.1} parent=1 // loop_header_branch
      %19 = sbr.rel (%p17) target = $region8
    $region5: #{tpu_custom_call.1} parent=1 // loop_body
      %s21 = ssub.s32 %s16, 1
      %s22 = ssub.s32 %s16, 2
      %s29 = sadd.s32 1, %s24
      %p30 = scmp.ge.s32.totalorder %s29, 1
      %s31 = scalar_select %p30, 0, %s29
      %s32 = sadd.s32 1, %s23
      %s33 = scalar_select %p30, %s32, %s23
      %p34 = scmp.ge.s32.totalorder %s33, 4
      %s35 = scalar_select %p34, 0, %s33
      %s36 = ssub.s32 %s24, %s31
      %p37 = scmp.eq.s32.totalorder %s36, 0
      %s39 = sadd.s32 %s38, 1
      %s40 = scalar_select %p37, %s38, %s39
      %p43 = pneg %p37
      %p44 = scmp.eq.s32.totalorder %s16, 3
      %p45 = por %p43, %p44
      %p46 = scmp.ne.s32.totalorder %s38, %s41
      %p47 = scmp.eq.s32.totalorder %s16, 0
      %p48 = por %p46, %p47
      %p49 = scmp.ne.s32.totalorder %s38, %s41
      %p50 = scmp.eq.s32.totalorder %s21, 3
      %p51 = por %p49, %p50
      %p52 = scmp.ne.s32.totalorder %s41, %s42
      %p53 = scmp.eq.s32.totalorder %s21, 0
      %p54 = por %p52, %p53
      %p55 = scmp.ne.s32.totalorder %s41, %s42
      %p56 = scmp.eq.s32.totalorder %s22, 3
      %p57 = por %p55, %p56
      %p59 = scmp.ne.s32.totalorder %s42, %s58
      %p60 = scmp.eq.s32.totalorder %s22, 0
      %p61 = por %p59, %p60
      %s62 = ssub.s32 %s23, %s35
      %p63 = scmp.eq.s32.totalorder %s62, 0
      %s65 = sadd.s32 %s64, 1
      %s66 = scalar_select %p63, %s64, %s65
      %p69 = pneg %p63
      %p70 = scmp.eq.s32.totalorder %s16, 3
      %p71 = por %p69, %p70
      %p72 = scmp.ne.s32.totalorder %s64, %s67
      %p73 = scmp.eq.s32.totalorder %s16, 0
      %p74 = por %p72, %p73
      %p75 = scmp.ne.s32.totalorder %s64, %s67
      %p76 = scmp.eq.s32.totalorder %s21, 3
      %p77 = por %p75, %p76
      %p78 = scmp.ne.s32.totalorder %s67, %s68
      %p79 = scmp.eq.s32.totalorder %s21, 0
      %p80 = por %p78, %p79
      %p81 = scmp.ne.s32.totalorder %s67, %s68
      %p82 = scmp.eq.s32.totalorder %s22, 3
      %p83 = por %p81, %p82
      %p85 = scmp.ne.s32.totalorder %s68, %s84
      %p86 = scmp.eq.s32.totalorder %s22, 0
      %p87 = por %p85, %p86
      %s88 = ssub.s32 %s23, %s35
      %p89 = scmp.eq.s32.totalorder %s88, 0
      %s91 = sadd.s32 %s90, 1
      %s92 = scalar_select %p89, %s90, %s91
      %p95 = pneg %p89
      %p96 = scmp.eq.s32.totalorder %s16, 3
      %p97 = por %p95, %p96
      %p98 = scmp.ne.s32.totalorder %s90, %s93
      %p99 = scmp.eq.s32.totalorder %s16, 0
      %p100 = por %p98, %p99
      %p101 = scmp.ne.s32.totalorder %s90, %s93
      %p102 = scmp.eq.s32.totalorder %s21, 3
      %p103 = por %p101, %p102
      %p104 = scmp.ne.s32.totalorder %s93, %s94
      %p105 = scmp.eq.s32.totalorder %s21, 0
      %p106 = por %p104, %p105
      %p107 = scmp.ne.s32.totalorder %s93, %s94
      %p108 = scmp.eq.s32.totalorder %s22, 3
      %p109 = por %p107, %p108
      %p111 = scmp.ne.s32.totalorder %s94, %s110
      %p112 = scmp.eq.s32.totalorder %s22, 0
      %p113 = por %p111, %p112
      %s114 = ssub.s32 %s24, %s31
      %s115 = ssub.s32 %s23, %s35
      %s116 = sor.u32 %s114, %s115
      %p117 = scmp.eq.s32.totalorder %s116, 0
      %s119 = sadd.s32 %s118, 1
      %s120 = scalar_select %p117, %s118, %s119
      %p123 = pneg %p117
      %p124 = scmp.eq.s32.totalorder %s16, 3
      %p125 = por %p123, %p124
      %p126 = scmp.ne.s32.totalorder %s118, %s121
      %p127 = scmp.eq.s32.totalorder %s16, 0
      %p128 = por %p126, %p127
      %p129 = scmp.ne.s32.totalorder %s118, %s121
      %p130 = scmp.eq.s32.totalorder %s21, 3
      %p131 = por %p129, %p130
      %p132 = scmp.ne.s32.totalorder %s121, %s122
      %p133 = scmp.eq.s32.totalorder %s21, 0
      %p134 = por %p132, %p133
      %p135 = scmp.ne.s32.totalorder %s121, %s122
      %p136 = scmp.eq.s32.totalorder %s22, 3
      %p137 = por %p135, %p136
      %p139 = scmp.ne.s32.totalorder %s122, %s138
      %p140 = scmp.eq.s32.totalorder %s22, 0
      %p141 = por %p139, %p140
      %p142 = scmp.le.s32.totalorder 1, %s16
      %p143 = scmp.lt.s32.totalorder %s16, 5
      %p144 = pnand %p142, %p143
      %p145 = pneg %p144
      // Predicated region
      $region9: #{tpu_custom_call.1} parent=5 // pred_check
        _
      $region10: #{tpu_custom_call.1} parent=5 // pred_check_branch
        %147 = sbr.rel (%p144) target = $region12
      $region11: #{tpu_custom_call.1} parent=5 // pred_region
        %s148 = ssub.s32 %s16, 1
        // Predicated region
        $region13: #{tpu_custom_call.1} parent=11 // pred_check
          %p149 = pneg %p54
        $region14: #{tpu_custom_call.1} parent=11 // pred_check_branch
          %151 = sbr.rel (%p149) target = $region16
        $region15: #{tpu_custom_call.1} parent=11 // pred_region
          %s152 = smul.u32 2, %s26
          %s154 = ssub.s32 512, 512
          %155 = vsyncadd [#allocation3], %s154
          %s156 = smul.addr %s152, 4
          %s157 = smul.addr %s156, 64
          %s158 = scalar_lea.hbm %s0, %s157
          %s159 = sshll.u32 [#allocation2], 4
          %s160 = int_to_ptr.vmem [resolvable:$true] %s159
          %165 = dma.hbm_to_vmem [thread:$0]  %s158, 512, %s160, [#allocation3], 256, 256, 16
        $region16: #{tpu_custom_call.1} parent=11 // pred_fallthru
          _
      $region12: #{tpu_custom_call.1} parent=5 // pred_fallthru
        _
      %p166 = scmp.lt.s32.totalorder %s16, 4
      // Predicated region
      $region17: #{tpu_custom_call.1} parent=5 // pred_check
        %p167 = pneg %p166
      $region18: #{tpu_custom_call.1} parent=5 // pred_check_branch
        %169 = sbr.rel (%p167) target = $region20
      $region19: #{tpu_custom_call.1} parent=5 // pred_region
        // Predicated region
        $region21: #{tpu_custom_call.1} parent=19 // pred_check
          %p170 = pneg %p74
        $region22: #{tpu_custom_call.1} parent=19 // pred_check_branch
          %172 = sbr.rel (%p170) target = $region24
        $region23: #{tpu_custom_call.1} parent=19 // pred_region
          %s173 = sand.u32 %s16, 1
          %s174 = scalar_lea.sflag [#allocation6], %s173
          %s175 = sand.u32 %s64, 1
          %s176 = smul.addr %s175, 1024
          %s177 = scalar_lea.vmem [#allocation5], %s176
          %s178 = smul.u32 4, %s23
          %s180 = ssub.s32 16384, 16384
          %181 = vsyncadd %s174, %s180
          %s182 = smul.addr %s178, 64
          %s183 = scalar_lea.hbm %s1, %s182
          %s184 = sshll.u32 %s177, 4
          %s185 = int_to_ptr.vmem [resolvable:$true] %s184
          %190 = dma.hbm_to_vmem [thread:$0]  %s183, 16384, %s185, %s174, 1024, 256, 16
        $region24: #{tpu_custom_call.1} parent=19 // pred_fallthru
          _
        // Predicated region
        $region25: #{tpu_custom_call.1} parent=19 // pred_check
          %p191 = pneg %p100
        $region26: #{tpu_custom_call.1} parent=19 // pred_check_branch
          %193 = sbr.rel (%p191) target = $region28
        $region27: #{tpu_custom_call.1} parent=19 // pred_region
          %s194 = sand.u32 %s16, 1
          %s195 = scalar_lea.sflag [#allocation6], %s194
          %s196 = sand.u32 %s90, 1
          %s197 = smul.addr %s196, 4
          %s198 = scalar_lea.vmem [#allocation7], %s197
          %s199 = smul.u32 4, %s23
          %s201 = ssub.s32 64, 64
          %202 = vsyncadd %s195, %s201
          %s203 = smul.addr %s199, 16
          %s204 = scalar_lea.hbm %s2, %s203
          %s206 = sshll.u32 %s198, 4
          %s207 = int_to_ptr.vmem [resolvable:$true] %s206
          %209 = dma.hbm_to_vmem [thread:$0]  %s204, 64, %s207, %s195
        $region28: #{tpu_custom_call.1} parent=19 // pred_fallthru
          _
      $region20: #{tpu_custom_call.1} parent=5 // pred_fallthru
        _
      %p210 = scmp.le.s32.totalorder 1, %s16
      %p211 = scmp.lt.s32.totalorder %s16, 5
      %p212 = pnand %p210, %p211
      %p213 = pneg %p212
      // Predicated region
      $region29: #{tpu_custom_call.1} parent=5 // pred_check
        _
      $region30: #{tpu_custom_call.1} parent=5 // pred_check_branch
        %215 = sbr.rel (%p212) target = $region32
      $region31: #{tpu_custom_call.1} parent=5 // pred_region
        %s216 = ssub.s32 %s16, 1
        // Predicated region
        $region33: #{tpu_custom_call.1} parent=31 // pred_check
          %p217 = pneg %p54
        $region34: #{tpu_custom_call.1} parent=31 // pred_check_branch
          %219 = sbr.rel (%p217) target = $region36
        $region35: #{tpu_custom_call.1} parent=31 // pred_region
          %220 = dma.done [#allocation3], 512
        $region36: #{tpu_custom_call.1} parent=31 // pred_fallthru
          _
        %s221 = sand.u32 %s21, 1
        %s222 = scalar_lea.sflag [#allocation6], %s221
        %s223 = sand.u32 %s67, 1
        %s224 = smul.addr %s223, 1024
        %s225 = scalar_lea.vmem [#allocation5], %s224
        // Predicated region
        $region37: #{tpu_custom_call.1} parent=31 // pred_check
          %p226 = pneg %p80
        $region38: #{tpu_custom_call.1} parent=31 // pred_check_branch
          %228 = sbr.rel (%p226) target = $region40
        $region39: #{tpu_custom_call.1} parent=31 // pred_region
          %229 = dma.done %s222, 16384
        $region40: #{tpu_custom_call.1} parent=31 // pred_fallthru
          _
        %s230 = sand.u32 %s21, 1
        %s231 = scalar_lea.sflag [#allocation6], %s230
        %s232 = sand.u32 %s93, 1
        %s233 = smul.addr %s232, 4
        %s234 = scalar_lea.vmem [#allocation7], %s233
        // Predicated region
        $region41: #{tpu_custom_call.1} parent=31 // pred_check
          %p235 = pneg %p106
        $region42: #{tpu_custom_call.1} parent=31 // pred_check_branch
          %237 = sbr.rel (%p235) target = $region44
        $region43: #{tpu_custom_call.1} parent=31 // pred_region
          %238 = dma.done %s231, 64
        $region44: #{tpu_custom_call.1} parent=31 // pred_fallthru
          _
        %p239 = pneg %p54
        %p240 = pneg %p51
        %s241 = sand.u32 %s21, 1
        %s242 = scalar_lea.sflag [#allocation6], %s241
        %s243 = sand.u32 %s67, 1
        %s244 = smul.addr %s243, 1024
        %s245 = scalar_lea.vmem [#allocation5], %s244
        %p246 = pneg %p80
        %p247 = pneg %p77
        %s248 = sand.u32 %s21, 1
        %s249 = scalar_lea.sflag [#allocation6], %s248
        %s250 = sand.u32 %s93, 1
        %s251 = smul.addr %s250, 4
        %s252 = scalar_lea.vmem [#allocation7], %s251
        %p253 = pneg %p106
        %p254 = pneg %p103
        %p255 = pneg %p134
        %p256 = pneg %p131
        %s257 = sand.u32 %s121, 1
        %s258 = scalar_lea.sflag [#allocation4], %s257
        %s259 = sand.u32 %s121, 1
        %s260 = smul.addr %s259, 32
        %s261 = scalar_lea.vmem [#allocation8], %s260
        %s262 = smul.u32 2, %s26
        %s263 = smul.u32 4, %s25
        %s264 = smul.u32 4, %s25
        %s265 = smul.u32 2, %s26
        %s266 = smul.u32 4, %s25
        %v267 = vld [vmem:[#allocation2] sm:$0xff]
        %v268 = vld [vmem:[#allocation2 + $0x8] sm:$0xff]
        %v269 = vld [vmem:[#allocation2 + $0x10] sm:$0xff]
        %v270 = vld [vmem:[#allocation2 + $0x18] sm:$0xff]
        %v271 = vld [vmem:[%s225] sm:$0xff]
        %v272 = vld [vmem:[%s225 + $0x8] sm:$0xff]
        %v273 = vld [vmem:[%s225 + $0x10] sm:$0xff]
        %v274 = vld [vmem:[%s225 + $0x18] sm:$0xff]
        %v275 = vld [vmem:[%s225 + $0x20] sm:$0xff]
        %v276 = vld [vmem:[%s225 + $0x28] sm:$0xff]
        %v277 = vld [vmem:[%s225 + $0x30] sm:$0xff]
        %v278 = vld [vmem:[%s225 + $0x38] sm:$0xff]
        %v279 = vld [vmem:[%s225 + $0x40] sm:$0xff]
        %v280 = vld [vmem:[%s225 + $0x48] sm:$0xff]
        %v281 = vld [vmem:[%s225 + $0x50] sm:$0xff]
        %v282 = vld [vmem:[%s225 + $0x58] sm:$0xff]
        %v283 = vld [vmem:[%s225 + $0x60] sm:$0xff]
        %v284 = vld [vmem:[%s225 + $0x68] sm:$0xff]
        %v285 = vld [vmem:[%s225 + $0x70] sm:$0xff]
        %v286 = vld [vmem:[%s225 + $0x78] sm:$0xff]
        %v287 = vld [vmem:[%s225 + $0x80] sm:$0xff]
        %v288 = vld [vmem:[%s225 + $0x88] sm:$0xff]
        %v289 = vld [vmem:[%s225 + $0x90] sm:$0xff]
        %v290 = vld [vmem:[%s225 + $0x98] sm:$0xff]
        %v291 = vld [vmem:[%s225 + $0xa0] sm:$0xff]
        %v292 = vld [vmem:[%s225 + $0xa8] sm:$0xff]
        %v293 = vld [vmem:[%s225 + $0xb0] sm:$0xff]
        %v294 = vld [vmem:[%s225 + $0xb8] sm:$0xff]
        %v295 = vld [vmem:[%s225 + $0xc0] sm:$0xff]
        %v296 = vld [vmem:[%s225 + $0xc8] sm:$0xff]
        %v297 = vld [vmem:[%s225 + $0xd0] sm:$0xff]
        %v298 = vld [vmem:[%s225 + $0xd8] sm:$0xff]
        %v299 = vld [vmem:[%s225 + $0xe0] sm:$0xff]
        %v300 = vld [vmem:[%s225 + $0xe8] sm:$0xff]
        %v301 = vld [vmem:[%s225 + $0xf0] sm:$0xff]
        %v302 = vld [vmem:[%s225 + $0xf8] sm:$0xff]
        %v303 = vld [vmem:[%s225 + $0x100] sm:$0xff]
        %v304 = vld [vmem:[%s225 + $0x108] sm:$0xff]
        %v305 = vld [vmem:[%s225 + $0x110] sm:$0xff]
        %v306 = vld [vmem:[%s225 + $0x118] sm:$0xff]
        %v307 = vld [vmem:[%s225 + $0x120] sm:$0xff]
        %v308 = vld [vmem:[%s225 + $0x128] sm:$0xff]
        %v309 = vld [vmem:[%s225 + $0x130] sm:$0xff]
        %v310 = vld [vmem:[%s225 + $0x138] sm:$0xff]
        %v311 = vld [vmem:[%s225 + $0x140] sm:$0xff]
        %v312 = vld [vmem:[%s225 + $0x148] sm:$0xff]
        %v313 = vld [vmem:[%s225 + $0x150] sm:$0xff]
        %v314 = vld [vmem:[%s225 + $0x158] sm:$0xff]
        %v315 = vld [vmem:[%s225 + $0x160] sm:$0xff]
        %v316 = vld [vmem:[%s225 + $0x168] sm:$0xff]
        %v317 = vld [vmem:[%s225 + $0x170] sm:$0xff]
        %v318 = vld [vmem:[%s225 + $0x178] sm:$0xff]
        %v319 = vld [vmem:[%s225 + $0x180] sm:$0xff]
        %v320 = vld [vmem:[%s225 + $0x188] sm:$0xff]
        %v321 = vld [vmem:[%s225 + $0x190] sm:$0xff]
        %v322 = vld [vmem:[%s225 + $0x198] sm:$0xff]
        %v323 = vld [vmem:[%s225 + $0x1a0] sm:$0xff]
        %v324 = vld [vmem:[%s225 + $0x1a8] sm:$0xff]
        %v325 = vld [vmem:[%s225 + $0x1b0] sm:$0xff]
        %v326 = vld [vmem:[%s225 + $0x1b8] sm:$0xff]
        %v327 = vld [vmem:[%s225 + $0x1c0] sm:$0xff]
        %v328 = vld [vmem:[%s225 + $0x1c8] sm:$0xff]
        %v329 = vld [vmem:[%s225 + $0x1d0] sm:$0xff]
        %v330 = vld [vmem:[%s225 + $0x1d8] sm:$0xff]
        %v331 = vld [vmem:[%s225 + $0x1e0] sm:$0xff]
        %v332 = vld [vmem:[%s225 + $0x1e8] sm:$0xff]
        %v333 = vld [vmem:[%s225 + $0x1f0] sm:$0xff]
        %v334 = vld [vmem:[%s225 + $0x1f8] sm:$0xff]
        %v335 = vld [vmem:[%s225 + $0x200] sm:$0xff]
        %v336 = vld [vmem:[%s225 + $0x208] sm:$0xff]
        %v337 = vld [vmem:[%s225 + $0x210] sm:$0xff]
        %v338 = vld [vmem:[%s225 + $0x218] sm:$0xff]
        %v339 = vld [vmem:[%s225 + $0x220] sm:$0xff]
        %v340 = vld [vmem:[%s225 + $0x228] sm:$0xff]
        %v341 = vld [vmem:[%s225 + $0x230] sm:$0xff]
        %v342 = vld [vmem:[%s225 + $0x238] sm:$0xff]
        %v343 = vld [vmem:[%s225 + $0x240] sm:$0xff]
        %v344 = vld [vmem:[%s225 + $0x248] sm:$0xff]
        %v345 = vld [vmem:[%s225 + $0x250] sm:$0xff]
        %v346 = vld [vmem:[%s225 + $0x258] sm:$0xff]
        %v347 = vld [vmem:[%s225 + $0x260] sm:$0xff]
        %v348 = vld [vmem:[%s225 + $0x268] sm:$0xff]
        %v349 = vld [vmem:[%s225 + $0x270] sm:$0xff]
        %v350 = vld [vmem:[%s225 + $0x278] sm:$0xff]
        %v351 = vld [vmem:[%s225 + $0x280] sm:$0xff]
        %v352 = vld [vmem:[%s225 + $0x288] sm:$0xff]
        %v353 = vld [vmem:[%s225 + $0x290] sm:$0xff]
        %v354 = vld [vmem:[%s225 + $0x298] sm:$0xff]
        %v355 = vld [vmem:[%s225 + $0x2a0] sm:$0xff]
        %v356 = vld [vmem:[%s225 + $0x2a8] sm:$0xff]
        %v357 = vld [vmem:[%s225 + $0x2b0] sm:$0xff]
        %v358 = vld [vmem:[%s225 + $0x2b8] sm:$0xff]
        %v359 = vld [vmem:[%s225 + $0x2c0] sm:$0xff]
        %v360 = vld [vmem:[%s225 + $0x2c8] sm:$0xff]
        %v361 = vld [vmem:[%s225 + $0x2d0] sm:$0xff]
        %v362 = vld [vmem:[%s225 + $0x2d8] sm:$0xff]
        %v363 = vld [vmem:[%s225 + $0x2e0] sm:$0xff]
        %v364 = vld [vmem:[%s225 + $0x2e8] sm:$0xff]
        %v365 = vld [vmem:[%s225 + $0x2f0] sm:$0xff]
        %v366 = vld [vmem:[%s225 + $0x2f8] sm:$0xff]
        %v367 = vld [vmem:[%s225 + $0x300] sm:$0xff]
        %v368 = vld [vmem:[%s225 + $0x308] sm:$0xff]
        %v369 = vld [vmem:[%s225 + $0x310] sm:$0xff]
        %v370 = vld [vmem:[%s225 + $0x318] sm:$0xff]
        %v371 = vld [vmem:[%s225 + $0x320] sm:$0xff]
        %v372 = vld [vmem:[%s225 + $0x328] sm:$0xff]
        %v373 = vld [vmem:[%s225 + $0x330] sm:$0xff]
        %v374 = vld [vmem:[%s225 + $0x338] sm:$0xff]
        %v375 = vld [vmem:[%s225 + $0x340] sm:$0xff]
        %v376 = vld [vmem:[%s225 + $0x348] sm:$0xff]
        %v377 = vld [vmem:[%s225 + $0x350] sm:$0xff]
        %v378 = vld [vmem:[%s225 + $0x358] sm:$0xff]
        %v379 = vld [vmem:[%s225 + $0x360] sm:$0xff]
        %v380 = vld [vmem:[%s225 + $0x368] sm:$0xff]
        %v381 = vld [vmem:[%s225 + $0x370] sm:$0xff]
        %v382 = vld [vmem:[%s225 + $0x378] sm:$0xff]
        %v383 = vld [vmem:[%s225 + $0x380] sm:$0xff]
        %v384 = vld [vmem:[%s225 + $0x388] sm:$0xff]
        %v385 = vld [vmem:[%s225 + $0x390] sm:$0xff]
        %v386 = vld [vmem:[%s225 + $0x398] sm:$0xff]
        %v387 = vld [vmem:[%s225 + $0x3a0] sm:$0xff]
        %v388 = vld [vmem:[%s225 + $0x3a8] sm:$0xff]
        %v389 = vld [vmem:[%s225 + $0x3b0] sm:$0xff]
        %v390 = vld [vmem:[%s225 + $0x3b8] sm:$0xff]
        %v391 = vld [vmem:[%s225 + $0x3c0] sm:$0xff]
        %v392 = vld [vmem:[%s225 + $0x3c8] sm:$0xff]
        %v393 = vld [vmem:[%s225 + $0x3d0] sm:$0xff]
        %v394 = vld [vmem:[%s225 + $0x3d8] sm:$0xff]
        %v395 = vld [vmem:[%s225 + $0x3e0] sm:$0xff]
        %v396 = vld [vmem:[%s225 + $0x3e8] sm:$0xff]
        %v397 = vld [vmem:[%s225 + $0x3f0] sm:$0xff]
        %v398 = vld [vmem:[%s225 + $0x3f8] sm:$0xff]
        %v399 = vld [vmem:[%s234] sm:$0xf]
        %v401 = vlaneseq
        %v402 = vshrl.u32 %v401, 7
        %v403 = vsub.s32 0, %v402
        %v404 = vrot.slane %v399, %v403
        %v405 = vlaneseq
        %v406 = vshrl.u32 %v405, 7
        %v407 = vsub.s32 1, %v406
        %v408 = vrot.slane %v399, %v407
        %v409 = vlaneseq
        %v410 = vshrl.u32 %v409, 7
        %v411 = vsub.s32 2, %v410
        %v412 = vrot.slane %v399, %v411
        %v413 = vlaneseq
        %v414 = vshrl.u32 %v413, 7
        %v415 = vsub.s32 3, %v414
        %v416 = vrot.slane %v399, %v415
        %v425 = vunpack.c.l.b16 %v267
        %v426 = vunpack.c.h.b16 %v267
        %v427 = vunpack.c.l.b16 %v268
        %v428 = vunpack.c.h.b16 %v268
        %v429 = vunpack.c.l.b16 %v269
        %v430 = vunpack.c.h.b16 %v269
        %v431 = vunpack.c.l.b16 %v270
        %v432 = vunpack.c.h.b16 %v270
        %v433 = vpack.c.b16 %v429, %v425
        %v434 = vpack.c.b16 %v430, %v426
        %v435 = vpack.c.b16 %v431, %v427
        %v436 = vpack.c.b16 %v432, %v428
        %v569 = vunpack.c.l.b16 %v271
        %v570 = vunpack.c.h.b16 %v271
        %v571 = vunpack.c.l.b16 %v272
        %v572 = vunpack.c.h.b16 %v272
        %v573 = vunpack.c.l.b16 %v273
        %v574 = vunpack.c.h.b16 %v273
        %v575 = vunpack.c.l.b16 %v274
        %v576 = vunpack.c.h.b16 %v274
        %v577 = vunpack.c.l.b16 %v275
        %v578 = vunpack.c.h.b16 %v275
        %v579 = vunpack.c.l.b16 %v276
        %v580 = vunpack.c.h.b16 %v276
        %v581 = vunpack.c.l.b16 %v277
        %v582 = vunpack.c.h.b16 %v277
        %v583 = vunpack.c.l.b16 %v278
        %v584 = vunpack.c.h.b16 %v278
        %v585 = vunpack.c.l.b16 %v279
        %v586 = vunpack.c.h.b16 %v279
        %v587 = vunpack.c.l.b16 %v280
        %v588 = vunpack.c.h.b16 %v280
        %v589 = vunpack.c.l.b16 %v281
        %v590 = vunpack.c.h.b16 %v281
        %v591 = vunpack.c.l.b16 %v282
        %v592 = vunpack.c.h.b16 %v282
        %v593 = vunpack.c.l.b16 %v283
        %v594 = vunpack.c.h.b16 %v283
        %v595 = vunpack.c.l.b16 %v284
        %v596 = vunpack.c.h.b16 %v284
        %v597 = vunpack.c.l.b16 %v285
        %v598 = vunpack.c.h.b16 %v285
        %v599 = vunpack.c.l.b16 %v286
        %v600 = vunpack.c.h.b16 %v286
        %v601 = vunpack.c.l.b16 %v287
        %v602 = vunpack.c.h.b16 %v287
        %v603 = vunpack.c.l.b16 %v288
        %v604 = vunpack.c.h.b16 %v288
        %v605 = vunpack.c.l.b16 %v289
        %v606 = vunpack.c.h.b16 %v289
        %v607 = vunpack.c.l.b16 %v290
        %v608 = vunpack.c.h.b16 %v290
        %v609 = vunpack.c.l.b16 %v291
        %v610 = vunpack.c.h.b16 %v291
        %v611 = vunpack.c.l.b16 %v292
        %v612 = vunpack.c.h.b16 %v292
        %v613 = vunpack.c.l.b16 %v293
        %v614 = vunpack.c.h.b16 %v293
        %v615 = vunpack.c.l.b16 %v294
        %v616 = vunpack.c.h.b16 %v294
        %v617 = vunpack.c.l.b16 %v295
        %v618 = vunpack.c.h.b16 %v295
        %v619 = vunpack.c.l.b16 %v296
        %v620 = vunpack.c.h.b16 %v296
        %v621 = vunpack.c.l.b16 %v297
        %v622 = vunpack.c.h.b16 %v297
        %v623 = vunpack.c.l.b16 %v298
        %v624 = vunpack.c.h.b16 %v298
        %v625 = vunpack.c.l.b16 %v299
        %v626 = vunpack.c.h.b16 %v299
        %v627 = vunpack.c.l.b16 %v300
        %v628 = vunpack.c.h.b16 %v300
        %v629 = vunpack.c.l.b16 %v301
        %v630 = vunpack.c.h.b16 %v301
        %v631 = vunpack.c.l.b16 %v302
        %v632 = vunpack.c.h.b16 %v302
        %v633 = vunpack.c.l.b16 %v303
        %v634 = vunpack.c.h.b16 %v303
        %v635 = vunpack.c.l.b16 %v304
        %v636 = vunpack.c.h.b16 %v304
        %v637 = vunpack.c.l.b16 %v305
        %v638 = vunpack.c.h.b16 %v305
        %v639 = vunpack.c.l.b16 %v306
        %v640 = vunpack.c.h.b16 %v306
        %v641 = vunpack.c.l.b16 %v307
        %v642 = vunpack.c.h.b16 %v307
        %v643 = vunpack.c.l.b16 %v308
        %v644 = vunpack.c.h.b16 %v308
        %v645 = vunpack.c.l.b16 %v309
        %v646 = vunpack.c.h.b16 %v309
        %v647 = vunpack.c.l.b16 %v310
        %v648 = vunpack.c.h.b16 %v310
        %v649 = vunpack.c.l.b16 %v311
        %v650 = vunpack.c.h.b16 %v311
        %v651 = vunpack.c.l.b16 %v312
        %v652 = vunpack.c.h.b16 %v312
        %v653 = vunpack.c.l.b16 %v313
        %v654 = vunpack.c.h.b16 %v313
        %v655 = vunpack.c.l.b16 %v314
        %v656 = vunpack.c.h.b16 %v314
        %v657 = vunpack.c.l.b16 %v315
        %v658 = vunpack.c.h.b16 %v315
        %v659 = vunpack.c.l.b16 %v316
        %v660 = vunpack.c.h.b16 %v316
        %v661 = vunpack.c.l.b16 %v317
        %v662 = vunpack.c.h.b16 %v317
        %v663 = vunpack.c.l.b16 %v318
        %v664 = vunpack.c.h.b16 %v318
        %v665 = vunpack.c.l.b16 %v319
        %v666 = vunpack.c.h.b16 %v319
        %v667 = vunpack.c.l.b16 %v320
        %v668 = vunpack.c.h.b16 %v320
        %v669 = vunpack.c.l.b16 %v321
        %v670 = vunpack.c.h.b16 %v321
        %v671 = vunpack.c.l.b16 %v322
        %v672 = vunpack.c.h.b16 %v322
        %v673 = vunpack.c.l.b16 %v323
        %v674 = vunpack.c.h.b16 %v323
        %v675 = vunpack.c.l.b16 %v324
        %v676 = vunpack.c.h.b16 %v324
        %v677 = vunpack.c.l.b16 %v325
        %v678 = vunpack.c.h.b16 %v325
        %v679 = vunpack.c.l.b16 %v326
        %v680 = vunpack.c.h.b16 %v326
        %v681 = vunpack.c.l.b16 %v327
        %v682 = vunpack.c.h.b16 %v327
        %v683 = vunpack.c.l.b16 %v328
        %v684 = vunpack.c.h.b16 %v328
        %v685 = vunpack.c.l.b16 %v329
        %v686 = vunpack.c.h.b16 %v329
        %v687 = vunpack.c.l.b16 %v330
        %v688 = vunpack.c.h.b16 %v330
        %v689 = vunpack.c.l.b16 %v331
        %v690 = vunpack.c.h.b16 %v331
        %v691 = vunpack.c.l.b16 %v332
        %v692 = vunpack.c.h.b16 %v332
        %v693 = vunpack.c.l.b16 %v333
        %v694 = vunpack.c.h.b16 %v333
        %v695 = vunpack.c.l.b16 %v334
        %v696 = vunpack.c.h.b16 %v334
        %v697 = vunpack.c.l.b16 %v335
        %v698 = vunpack.c.h.b16 %v335
        %v699 = vunpack.c.l.b16 %v336
        %v700 = vunpack.c.h.b16 %v336
        %v701 = vunpack.c.l.b16 %v337
        %v702 = vunpack.c.h.b16 %v337
        %v703 = vunpack.c.l.b16 %v338
        %v704 = vunpack.c.h.b16 %v338
        %v705 = vunpack.c.l.b16 %v339
        %v706 = vunpack.c.h.b16 %v339
        %v707 = vunpack.c.l.b16 %v340
        %v708 = vunpack.c.h.b16 %v340
        %v709 = vunpack.c.l.b16 %v341
        %v710 = vunpack.c.h.b16 %v341
        %v711 = vunpack.c.l.b16 %v342
        %v712 = vunpack.c.h.b16 %v342
        %v713 = vunpack.c.l.b16 %v343
        %v714 = vunpack.c.h.b16 %v343
        %v715 = vunpack.c.l.b16 %v344
        %v716 = vunpack.c.h.b16 %v344
        %v717 = vunpack.c.l.b16 %v345
        %v718 = vunpack.c.h.b16 %v345
        %v719 = vunpack.c.l.b16 %v346
        %v720 = vunpack.c.h.b16 %v346
        %v721 = vunpack.c.l.b16 %v347
        %v722 = vunpack.c.h.b16 %v347
        %v723 = vunpack.c.l.b16 %v348
        %v724 = vunpack.c.h.b16 %v348
        %v725 = vunpack.c.l.b16 %v349
        %v726 = vunpack.c.h.b16 %v349
        %v727 = vunpack.c.l.b16 %v350
        %v728 = vunpack.c.h.b16 %v350
        %v729 = vunpack.c.l.b16 %v351
        %v730 = vunpack.c.h.b16 %v351
        %v731 = vunpack.c.l.b16 %v352
        %v732 = vunpack.c.h.b16 %v352
        %v733 = vunpack.c.l.b16 %v353
        %v734 = vunpack.c.h.b16 %v353
        %v735 = vunpack.c.l.b16 %v354
        %v736 = vunpack.c.h.b16 %v354
        %v737 = vunpack.c.l.b16 %v355
        %v738 = vunpack.c.h.b16 %v355
        %v739 = vunpack.c.l.b16 %v356
        %v740 = vunpack.c.h.b16 %v356
        %v741 = vunpack.c.l.b16 %v357
        %v742 = vunpack.c.h.b16 %v357
        %v743 = vunpack.c.l.b16 %v358
        %v744 = vunpack.c.h.b16 %v358
        %v745 = vunpack.c.l.b16 %v359
        %v746 = vunpack.c.h.b16 %v359
        %v747 = vunpack.c.l.b16 %v360
        %v748 = vunpack.c.h.b16 %v360
        %v749 = vunpack.c.l.b16 %v361
        %v750 = vunpack.c.h.b16 %v361
        %v751 = vunpack.c.l.b16 %v362
        %v752 = vunpack.c.h.b16 %v362
        %v753 = vunpack.c.l.b16 %v363
        %v754 = vunpack.c.h.b16 %v363
        %v755 = vunpack.c.l.b16 %v364
        %v756 = vunpack.c.h.b16 %v364
        %v757 = vunpack.c.l.b16 %v365
        %v758 = vunpack.c.h.b16 %v365
        %v759 = vunpack.c.l.b16 %v366
        %v760 = vunpack.c.h.b16 %v366
        %v761 = vunpack.c.l.b16 %v367
        %v762 = vunpack.c.h.b16 %v367
        %v763 = vunpack.c.l.b16 %v368
        %v764 = vunpack.c.h.b16 %v368
        %v765 = vunpack.c.l.b16 %v369
        %v766 = vunpack.c.h.b16 %v369
        %v767 = vunpack.c.l.b16 %v370
        %v768 = vunpack.c.h.b16 %v370
        %v769 = vunpack.c.l.b16 %v371
        %v770 = vunpack.c.h.b16 %v371
        %v771 = vunpack.c.l.b16 %v372
        %v772 = vunpack.c.h.b16 %v372
        %v773 = vunpack.c.l.b16 %v373
        %v774 = vunpack.c.h.b16 %v373
        %v775 = vunpack.c.l.b16 %v374
        %v776 = vunpack.c.h.b16 %v374
        %v777 = vunpack.c.l.b16 %v375
        %v778 = vunpack.c.h.b16 %v375
        %v779 = vunpack.c.l.b16 %v376
        %v780 = vunpack.c.h.b16 %v376
        %v781 = vunpack.c.l.b16 %v377
        %v782 = vunpack.c.h.b16 %v377
        %v783 = vunpack.c.l.b16 %v378
        %v784 = vunpack.c.h.b16 %v378
        %v785 = vunpack.c.l.b16 %v379
        %v786 = vunpack.c.h.b16 %v379
        %v787 = vunpack.c.l.b16 %v380
        %v788 = vunpack.c.h.b16 %v380
        %v789 = vunpack.c.l.b16 %v381
        %v790 = vunpack.c.h.b16 %v381
        %v791 = vunpack.c.l.b16 %v382
        %v792 = vunpack.c.h.b16 %v382
        %v793 = vunpack.c.l.b16 %v383
        %v794 = vunpack.c.h.b16 %v383
        %v795 = vunpack.c.l.b16 %v384
        %v796 = vunpack.c.h.b16 %v384
        %v797 = vunpack.c.l.b16 %v385
        %v798 = vunpack.c.h.b16 %v385
        %v799 = vunpack.c.l.b16 %v386
        %v800 = vunpack.c.h.b16 %v386
        %v801 = vunpack.c.l.b16 %v387
        %v802 = vunpack.c.h.b16 %v387
        %v803 = vunpack.c.l.b16 %v388
        %v804 = vunpack.c.h.b16 %v388
        %v805 = vunpack.c.l.b16 %v389
        %v806 = vunpack.c.h.b16 %v389
        %v807 = vunpack.c.l.b16 %v390
        %v808 = vunpack.c.h.b16 %v390
        %v809 = vunpack.c.l.b16 %v391
        %v810 = vunpack.c.h.b16 %v391
        %v811 = vunpack.c.l.b16 %v392
        %v812 = vunpack.c.h.b16 %v392
        %v813 = vunpack.c.l.b16 %v393
        %v814 = vunpack.c.h.b16 %v393
        %v815 = vunpack.c.l.b16 %v394
        %v816 = vunpack.c.h.b16 %v394
        %v817 = vunpack.c.l.b16 %v395
        %v818 = vunpack.c.h.b16 %v395
        %v819 = vunpack.c.l.b16 %v396
        %v820 = vunpack.c.h.b16 %v396
        %v821 = vunpack.c.l.b16 %v397
        %v822 = vunpack.c.h.b16 %v397
        %v823 = vunpack.c.l.b16 %v398
        %v824 = vunpack.c.h.b16 %v398
        %v825 = vpack.c.b16 %v573, %v569
        %v826 = vpack.c.b16 %v574, %v570
        %v827 = vpack.c.b16 %v575, %v571
        %v828 = vpack.c.b16 %v576, %v572
        %v829 = vpack.c.b16 %v581, %v577
        %v830 = vpack.c.b16 %v582, %v578
        %v831 = vpack.c.b16 %v583, %v579
        %v832 = vpack.c.b16 %v584, %v580
        %v833 = vpack.c.b16 %v589, %v585
        %v834 = vpack.c.b16 %v590, %v586
        %v835 = vpack.c.b16 %v591, %v587
        %v836 = vpack.c.b16 %v592, %v588
        %v837 = vpack.c.b16 %v597, %v593
        %v838 = vpack.c.b16 %v598, %v594
        %v839 = vpack.c.b16 %v599, %v595
        %v840 = vpack.c.b16 %v600, %v596
        %v841 = vpack.c.b16 %v605, %v601
        %v842 = vpack.c.b16 %v606, %v602
        %v843 = vpack.c.b16 %v607, %v603
        %v844 = vpack.c.b16 %v608, %v604
        %v845 = vpack.c.b16 %v613, %v609
        %v846 = vpack.c.b16 %v614, %v610
        %v847 = vpack.c.b16 %v615, %v611
        %v848 = vpack.c.b16 %v616, %v612
        %v849 = vpack.c.b16 %v621, %v617
        %v850 = vpack.c.b16 %v622, %v618
        %v851 = vpack.c.b16 %v623, %v619
        %v852 = vpack.c.b16 %v624, %v620
        %v853 = vpack.c.b16 %v629, %v625
        %v854 = vpack.c.b16 %v630, %v626
        %v855 = vpack.c.b16 %v631, %v627
        %v856 = vpack.c.b16 %v632, %v628
        %v857 = vpack.c.b16 %v637, %v633
        %v858 = vpack.c.b16 %v638, %v634
        %v859 = vpack.c.b16 %v639, %v635
        %v860 = vpack.c.b16 %v640, %v636
        %v861 = vpack.c.b16 %v645, %v641
        %v862 = vpack.c.b16 %v646, %v642
        %v863 = vpack.c.b16 %v647, %v643
        %v864 = vpack.c.b16 %v648, %v644
        %v865 = vpack.c.b16 %v653, %v649
        %v866 = vpack.c.b16 %v654, %v650
        %v867 = vpack.c.b16 %v655, %v651
        %v868 = vpack.c.b16 %v656, %v652
        %v869 = vpack.c.b16 %v661, %v657
        %v870 = vpack.c.b16 %v662, %v658
        %v871 = vpack.c.b16 %v663, %v659
        %v872 = vpack.c.b16 %v664, %v660
        %v873 = vpack.c.b16 %v669, %v665
        %v874 = vpack.c.b16 %v670, %v666
        %v875 = vpack.c.b16 %v671, %v667
        %v876 = vpack.c.b16 %v672, %v668
        %v877 = vpack.c.b16 %v677, %v673
        %v878 = vpack.c.b16 %v678, %v674
        %v879 = vpack.c.b16 %v679, %v675
        %v880 = vpack.c.b16 %v680, %v676
        %v881 = vpack.c.b16 %v685, %v681
        %v882 = vpack.c.b16 %v686, %v682
        %v883 = vpack.c.b16 %v687, %v683
        %v884 = vpack.c.b16 %v688, %v684
        %v885 = vpack.c.b16 %v693, %v689
        %v886 = vpack.c.b16 %v694, %v690
        %v887 = vpack.c.b16 %v695, %v691
        %v888 = vpack.c.b16 %v696, %v692
        %v889 = vpack.c.b16 %v701, %v697
        %v890 = vpack.c.b16 %v702, %v698
        %v891 = vpack.c.b16 %v703, %v699
        %v892 = vpack.c.b16 %v704, %v700
        %v893 = vpack.c.b16 %v709, %v705
        %v894 = vpack.c.b16 %v710, %v706
        %v895 = vpack.c.b16 %v711, %v707
        %v896 = vpack.c.b16 %v712, %v708
        %v897 = vpack.c.b16 %v717, %v713
        %v898 = vpack.c.b16 %v718, %v714
        %v899 = vpack.c.b16 %v719, %v715
        %v900 = vpack.c.b16 %v720, %v716
        %v901 = vpack.c.b16 %v725, %v721
        %v902 = vpack.c.b16 %v726, %v722
        %v903 = vpack.c.b16 %v727, %v723
        %v904 = vpack.c.b16 %v728, %v724
        %v905 = vpack.c.b16 %v733, %v729
        %v906 = vpack.c.b16 %v734, %v730
        %v907 = vpack.c.b16 %v735, %v731
        %v908 = vpack.c.b16 %v736, %v732
        %v909 = vpack.c.b16 %v741, %v737
        %v910 = vpack.c.b16 %v742, %v738
        %v911 = vpack.c.b16 %v743, %v739
        %v912 = vpack.c.b16 %v744, %v740
        %v913 = vpack.c.b16 %v749, %v745
        %v914 = vpack.c.b16 %v750, %v746
        %v915 = vpack.c.b16 %v751, %v747
        %v916 = vpack.c.b16 %v752, %v748
        %v917 = vpack.c.b16 %v757, %v753
        %v918 = vpack.c.b16 %v758, %v754
        %v919 = vpack.c.b16 %v759, %v755
        %v920 = vpack.c.b16 %v760, %v756
        %v921 = vpack.c.b16 %v765, %v761
        %v922 = vpack.c.b16 %v766, %v762
        %v923 = vpack.c.b16 %v767, %v763
        %v924 = vpack.c.b16 %v768, %v764
        %v925 = vpack.c.b16 %v773, %v769
        %v926 = vpack.c.b16 %v774, %v770
        %v927 = vpack.c.b16 %v775, %v771
        %v928 = vpack.c.b16 %v776, %v772
        %v929 = vpack.c.b16 %v781, %v777
        %v930 = vpack.c.b16 %v782, %v778
        %v931 = vpack.c.b16 %v783, %v779
        %v932 = vpack.c.b16 %v784, %v780
        %v933 = vpack.c.b16 %v789, %v785
        %v934 = vpack.c.b16 %v790, %v786
        %v935 = vpack.c.b16 %v791, %v787
        %v936 = vpack.c.b16 %v792, %v788
        %v937 = vpack.c.b16 %v797, %v793
        %v938 = vpack.c.b16 %v798, %v794
        %v939 = vpack.c.b16 %v799, %v795
        %v940 = vpack.c.b16 %v800, %v796
        %v941 = vpack.c.b16 %v805, %v801
        %v942 = vpack.c.b16 %v806, %v802
        %v943 = vpack.c.b16 %v807, %v803
        %v944 = vpack.c.b16 %v808, %v804
        %v945 = vpack.c.b16 %v813, %v809
        %v946 = vpack.c.b16 %v814, %v810
        %v947 = vpack.c.b16 %v815, %v811
        %v948 = vpack.c.b16 %v816, %v812
        %v949 = vpack.c.b16 %v821, %v817
        %v950 = vpack.c.b16 %v822, %v818
        %v951 = vpack.c.b16 %v823, %v819
        %v952 = vpack.c.b16 %v824, %v820
        %1081 = vmatprep.subr.bf16.mxu0 %v854
        %1082 = vmatpush1.bf16.msra.mxu0 %v853
        %1083 = vmatprep.subr.bf16.mxu0 %v850
        %1084 = vmatpush1.bf16.msra.mxu0 %v849
        %1085 = vmatprep.subr.bf16.mxu0 %v846
        %1086 = vmatpush1.bf16.msra.mxu0 %v845
        %1087 = vmatprep.subr.bf16.mxu0 %v842
        %1088 = vmatpush1.bf16.msra.mxu0 %v841
        %1089 = vmatprep.subr.bf16.mxu0 %v838
        %1090 = vmatpush1.bf16.msra.mxu0 %v837
        %1091 = vmatprep.subr.bf16.mxu0 %v834
        %1092 = vmatpush1.bf16.msra.mxu0 %v833
        %1093 = vmatprep.subr.bf16.mxu0 %v830
        %1094 = vmatpush1.bf16.msra.mxu0 %v829
        %1095 = vmatprep.subr.bf16.mxu0 %v826
        %1096 = vmatpush1.bf16.msra.mxu0 %v825
        %1097 = vmatprep.subr.bf16.mxu0 %v886
        %1098 = vmatpush2.bf16.msra.mxu0 %v885
        %1099 = vmatprep.subr.bf16.mxu0 %v882
        %1100 = vmatpush2.bf16.msra.mxu0 %v881
        %1101 = vmatprep.subr.bf16.mxu0 %v878
        %1102 = vmatpush2.bf16.msra.mxu0 %v877
        %1103 = vmatprep.subr.bf16.mxu0 %v874
        %1104 = vmatpush2.bf16.msra.mxu0 %v873
        %1105 = vmatprep.subr.bf16.mxu0 %v870
        %1106 = vmatpush2.bf16.msra.mxu0 %v869
        %1107 = vmatprep.subr.bf16.mxu0 %v866
        %1108 = vmatpush2.bf16.msra.mxu0 %v865
        %1109 = vmatprep.subr.bf16.mxu0 %v862
        %1110 = vmatpush2.bf16.msra.mxu0 %v861
        %1111 = vmatprep.subr.bf16.mxu0 %v858
        %1112 = vmatpush2.bf16.msra.mxu0 %v857
        %1113 = vmatprep.mubr.bf16.mxu0 %v434
        %1114 = vmatmul.mubr.bf16.gmra.mxu0 %v433
        %v1115 = vpop.f32.mrf.mxu0
        %v1116 = vadd.f32 %v404, %v1115
        %v1117 = vpop.f32.mrf.mxu0
        %v1118 = vadd.f32 %v408, %v1117
        %v1119 = vpop.f32.mrf.mxu0
        %v1120 = vadd.f32 %v404, %v1119
        %v1121 = vpop.f32.mrf.mxu0
        %v1122 = vadd.f32 %v408, %v1121
        %1123 = vdwg.mxu0
        %1124 = vmatprep.subr.bf16.mxu0 %v918
        %1125 = vmatpush1.bf16.msra.mxu0 %v917
        %1126 = vmatprep.subr.bf16.mxu0 %v914
        %1127 = vmatpush1.bf16.msra.mxu0 %v913
        %1128 = vmatprep.subr.bf16.mxu0 %v910
        %1129 = vmatpush1.bf16.msra.mxu0 %v909
        %1130 = vmatprep.subr.bf16.mxu0 %v906
        %1131 = vmatpush1.bf16.msra.mxu0 %v905
        %1132 = vmatprep.subr.bf16.mxu0 %v902
        %1133 = vmatpush1.bf16.msra.mxu0 %v901
        %1134 = vmatprep.subr.bf16.mxu0 %v898
        %1135 = vmatpush1.bf16.msra.mxu0 %v897
        %1136 = vmatprep.subr.bf16.mxu0 %v894
        %1137 = vmatpush1.bf16.msra.mxu0 %v893
        %1138 = vmatprep.subr.bf16.mxu0 %v890
        %1139 = vmatpush1.bf16.msra.mxu0 %v889
        %1140 = vmatprep.subr.bf16.mxu0 %v950
        %1141 = vmatpush2.bf16.msra.mxu0 %v949
        %1142 = vmatprep.subr.bf16.mxu0 %v946
        %1143 = vmatpush2.bf16.msra.mxu0 %v945
        %1144 = vmatprep.subr.bf16.mxu0 %v942
        %1145 = vmatpush2.bf16.msra.mxu0 %v941
        %1146 = vmatprep.subr.bf16.mxu0 %v938
        %1147 = vmatpush2.bf16.msra.mxu0 %v937
        %1148 = vmatprep.subr.bf16.mxu0 %v934
        %1149 = vmatpush2.bf16.msra.mxu0 %v933
        %1150 = vmatprep.subr.bf16.mxu0 %v930
        %1151 = vmatpush2.bf16.msra.mxu0 %v929
        %1152 = vmatprep.subr.bf16.mxu0 %v926
        %1153 = vmatpush2.bf16.msra.mxu0 %v925
        %1154 = vmatprep.subr.bf16.mxu0 %v922
        %1155 = vmatpush2.bf16.msra.mxu0 %v921
        %1156 = vmatprep.mubr.bf16.mxu0 %v436
        %1157 = vmatmul.mubr.bf16.gmra.mxu0 %v435
        %v1158 = vpop.f32.mrf.mxu0
        %v1159 = vadd.f32 %v1116, %v1158
        %v1160 = vpop.f32.mrf.mxu0
        %v1161 = vadd.f32 %v1118, %v1160
        %v1162 = vpop.f32.mrf.mxu0
        %v1163 = vadd.f32 %v1120, %v1162
        %v1164 = vpop.f32.mrf.mxu0
        %v1165 = vadd.f32 %v1122, %v1164
        %1166 = vdwg.mxu0
        %1167 = vmatprep.subr.bf16.mxu0 %v856
        %1168 = vmatpush1.bf16.msra.mxu0 %v855
        %1169 = vmatprep.subr.bf16.mxu0 %v852
        %1170 = vmatpush1.bf16.msra.mxu0 %v851
        %1171 = vmatprep.subr.bf16.mxu0 %v848
        %1172 = vmatpush1.bf16.msra.mxu0 %v847
        %1173 = vmatprep.subr.bf16.mxu0 %v844
        %1174 = vmatpush1.bf16.msra.mxu0 %v843
        %1175 = vmatprep.subr.bf16.mxu0 %v840
        %1176 = vmatpush1.bf16.msra.mxu0 %v839
        %1177 = vmatprep.subr.bf16.mxu0 %v836
        %1178 = vmatpush1.bf16.msra.mxu0 %v835
        %1179 = vmatprep.subr.bf16.mxu0 %v832
        %1180 = vmatpush1.bf16.msra.mxu0 %v831
        %1181 = vmatprep.subr.bf16.mxu0 %v828
        %1182 = vmatpush1.bf16.msra.mxu0 %v827
        %1183 = vmatprep.subr.bf16.mxu0 %v888
        %1184 = vmatpush2.bf16.msra.mxu0 %v887
        %1185 = vmatprep.subr.bf16.mxu0 %v884
        %1186 = vmatpush2.bf16.msra.mxu0 %v883
        %1187 = vmatprep.subr.bf16.mxu0 %v880
        %1188 = vmatpush2.bf16.msra.mxu0 %v879
        %1189 = vmatprep.subr.bf16.mxu0 %v876
        %1190 = vmatpush2.bf16.msra.mxu0 %v875
        %1191 = vmatprep.subr.bf16.mxu0 %v872
        %1192 = vmatpush2.bf16.msra.mxu0 %v871
        %1193 = vmatprep.subr.bf16.mxu0 %v868
        %1194 = vmatpush2.bf16.msra.mxu0 %v867
        %1195 = vmatprep.subr.bf16.mxu0 %v864
        %1196 = vmatpush2.bf16.msra.mxu0 %v863
        %1197 = vmatprep.subr.bf16.mxu0 %v860
        %1198 = vmatpush2.bf16.msra.mxu0 %v859
        %1199 = vmatprep.mubr.bf16.mxu0 %v434
        %1200 = vmatmul.mubr.bf16.gmra.mxu0 %v433
        %v1201 = vpop.f32.mrf.mxu0
        %v1202 = vadd.f32 %v412, %v1201
        %v1203 = vpop.f32.mrf.mxu0
        %v1204 = vadd.f32 %v416, %v1203
        %v1205 = vpop.f32.mrf.mxu0
        %v1206 = vadd.f32 %v412, %v1205
        %v1207 = vpop.f32.mrf.mxu0
        %v1208 = vadd.f32 %v416, %v1207
        %1209 = vdwg.mxu0
        %1210 = vmatprep.subr.bf16.mxu0 %v920
        %1211 = vmatpush1.bf16.msra.mxu0 %v919
        %1212 = vmatprep.subr.bf16.mxu0 %v916
        %1213 = vmatpush1.bf16.msra.mxu0 %v915
        %1214 = vmatprep.subr.bf16.mxu0 %v912
        %1215 = vmatpush1.bf16.msra.mxu0 %v911
        %1216 = vmatprep.subr.bf16.mxu0 %v908
        %1217 = vmatpush1.bf16.msra.mxu0 %v907
        %1218 = vmatprep.subr.bf16.mxu0 %v904
        %1219 = vmatpush1.bf16.msra.mxu0 %v903
        %1220 = vmatprep.subr.bf16.mxu0 %v900
        %1221 = vmatpush1.bf16.msra.mxu0 %v899
        %1222 = vmatprep.subr.bf16.mxu0 %v896
        %1223 = vmatpush1.bf16.msra.mxu0 %v895
        %1224 = vmatprep.subr.bf16.mxu0 %v892
        %1225 = vmatpush1.bf16.msra.mxu0 %v891
        %1226 = vmatprep.subr.bf16.mxu0 %v952
        %1227 = vmatpush2.bf16.msra.mxu0 %v951
        %1228 = vmatprep.subr.bf16.mxu0 %v948
        %1229 = vmatpush2.bf16.msra.mxu0 %v947
        %1230 = vmatprep.subr.bf16.mxu0 %v944
        %1231 = vmatpush2.bf16.msra.mxu0 %v943
        %1232 = vmatprep.subr.bf16.mxu0 %v940
        %1233 = vmatpush2.bf16.msra.mxu0 %v939
        %1234 = vmatprep.subr.bf16.mxu0 %v936
        %1235 = vmatpush2.bf16.msra.mxu0 %v935
        %1236 = vmatprep.subr.bf16.mxu0 %v932
        %1237 = vmatpush2.bf16.msra.mxu0 %v931
        %1238 = vmatprep.subr.bf16.mxu0 %v928
        %1239 = vmatpush2.bf16.msra.mxu0 %v927
        %1240 = vmatprep.subr.bf16.mxu0 %v924
        %1241 = vmatpush2.bf16.msra.mxu0 %v923
        %1242 = vmatprep.mubr.bf16.mxu0 %v436
        %1243 = vmatmul.mubr.bf16.gmra.mxu0 %v435
        %v1244 = vpop.f32.mrf.mxu0
        %v1245 = vadd.f32 %v1202, %v1244
        %v1246 = vpop.f32.mrf.mxu0
        %v1247 = vadd.f32 %v1204, %v1246
        %v1248 = vpop.f32.mrf.mxu0
        %v1249 = vadd.f32 %v1206, %v1248
        %v1250 = vpop.f32.mrf.mxu0
        %v1251 = vadd.f32 %v1208, %v1250
        %1252 = vdwg.mxu0
        %v1253 = vpack.c.bf16 %v1163, %v1159
        %v1254 = vpack.c.bf16 %v1165, %v1161
        %v1255 = vpack.c.bf16 %v1249, %v1245
        %v1256 = vpack.c.bf16 %v1251, %v1247
        %v1261 = vunpack.c.l.b16 %v1253
        %v1262 = vunpack.c.l.b16 %v1254
        %v1263 = vunpack.c.l.b16 %v1255
        %v1264 = vunpack.c.l.b16 %v1256
        %v1265 = vunpack.c.h.b16 %v1253
        %v1266 = vunpack.c.h.b16 %v1254
        %v1267 = vunpack.c.h.b16 %v1255
        %v1268 = vunpack.c.h.b16 %v1256
        %v1269 = vpack.c.b16 %v1262, %v1261
        %v1270 = vpack.c.b16 %v1264, %v1263
        %v1271 = vpack.c.b16 %v1266, %v1265
        %v1272 = vpack.c.b16 %v1268, %v1267
        %1277 = vst [vmem:[%s261] sm:$0xff] %v1269
        %1278 = vst [vmem:[%s261 + $0x8] sm:$0xff] %v1270
        %1279 = vst [vmem:[%s261 + $0x10] sm:$0xff] %v1271
        %1280 = vst [vmem:[%s261 + $0x18] sm:$0xff] %v1272
        %s1281 = sand.u32 %s121, 1
        %s1282 = scalar_lea.sflag [#allocation4], %s1281
        %s1283 = sand.u32 %s121, 1
        %s1284 = smul.addr %s1283, 32
        %s1285 = scalar_lea.vmem [#allocation8], %s1284
        // Predicated region
        $region45: #{tpu_custom_call.1} parent=31 // pred_check
          %p1286 = pneg %p131
        $region46: #{tpu_custom_call.1} parent=31 // pred_check_branch
          %1288 = sbr.rel (%p1286) target = $region48
        $region47: #{tpu_custom_call.1} parent=31 // pred_region
          %s1289 = smul.u32 2, %s26
          %s1290 = smul.u32 4, %s25
          %s1292 = ssub.s32 512, 512
          %1293 = vsyncadd %s1282, %s1292
          %s1294 = smul.addr %s1289, 16
          %s1295 = sadd.s32 %s1290, %s1294
          %s1296 = smul.addr %s1295, 64
          %s1297 = scalar_lea.hbm %s3, %s1296
          %s1298 = sshll.u32 %s1285, 4
          %s1299 = int_to_ptr.vmem [resolvable:$true] %s1298
          %1304 = dma.vmem_to_hbm [thread:$0]  %s1299, 512, %s1297, %s1282, 256, 1024, 16
        $region48: #{tpu_custom_call.1} parent=31 // pred_fallthru
          _
      $region32: #{tpu_custom_call.1} parent=5 // pred_fallthru
        _
      %p1305 = scmp.le.s32.totalorder 2, %s16
      // Predicated region
      $region49: #{tpu_custom_call.1} parent=5 // pred_check
        %p1306 = pneg %p1305
      $region50: #{tpu_custom_call.1} parent=5 // pred_check_branch
        %1308 = sbr.rel (%p1306) target = $region52
      $region51: #{tpu_custom_call.1} parent=5 // pred_region
        %s1309 = ssub.s32 %s16, 2
        // Predicated region
        $region53: #{tpu_custom_call.1} parent=51 // pred_check
          %p1310 = pneg %p137
        $region54: #{tpu_custom_call.1} parent=51 // pred_check_branch
          %1312 = sbr.rel (%p1310) target = $region56
        $region55: #{tpu_custom_call.1} parent=51 // pred_region
          %s1313 = sand.u32 %s122, 1
          %s1314 = scalar_lea.sflag [#allocation4], %s1313
          %s1315 = sand.u32 %s122, 1
          %s1316 = smul.addr %s1315, 32
          %s1317 = scalar_lea.vmem [#allocation8], %s1316
          %1318 = dma.done %s1314, 512
        $region56: #{tpu_custom_call.1} parent=51 // pred_fallthru
          _
      $region52: #{tpu_custom_call.1} parent=5 // pred_fallthru
        _
    $region6: #{tpu_custom_call.1} parent=1 // loop_footer
      %s20 = sadd.s32 1, %s16
    $region7: #{tpu_custom_call.1} parent=1 // loop_footer_branch
      %15 = sbr.rel target = $region3
    $region8: #{tpu_custom_call.1} parent=1 // loop_exit
      _
    %1319 = vsyncpa [#allocation3], 1
    %s1320 = scalar_lea.sflag [#allocation3], 1
    %1321 = vsyncpa %s1320, 1
    %1322 = vsyncpa [#allocation6], 1
    %s1323 = scalar_lea.sflag [#allocation6], 1
    %1324 = vsyncpa %s1323, 1
    %1325 = vsyncpa [#allocation4], 1
    %s1326 = scalar_lea.sflag [#allocation4], 1
    %1327 = vsyncpa %s1326, 1

</llo_original>
